<compile_context>
chip_gen: v7x
topology: tpu7x:2x2x1
jax: 0.10.0
libtpu: 0.0.40
codegen_flags: <defaults>
</compile_context>

<pallas_src>
import jax
import jax.numpy as jnp
from jax.experimental import pallas as pl
from jax.experimental.pallas import tpu as pltpu

WEIGHTS_DTYPE = jnp.bfloat16  # analogue of torch.float16 weights_dtype


def _round_up(n, m):
    return ((n + m - 1) // m) * m


def _mlp_cast_kernel(x_ref, w1_ref, b1_ref, w2_ref, b2_ref, o_ref):
    # x_ref: f32 (cast to bf16 in-kernel); w1_ref/w2_ref: bf16 (MXU-native);
    # b1_ref/b2_ref: f32.  Bias-add + SiLU stay in f32 (VPU/EUP), output cast
    # to o_ref.dtype implements ToWeightsDType's .to(dtype).
    x = x_ref[...].astype(jnp.bfloat16)                               # (tb, D_in)
    h = jnp.dot(x, w1_ref[...], preferred_element_type=jnp.float32)  # f32 accum
    h = h + b1_ref[...]                                               # (1, H) broadcast
    h = h * jax.nn.sigmoid(h)                                         # SiLU in f32
    y = jnp.dot(h.astype(jnp.bfloat16), w2_ref[...],                  # bf16 x bf16 -> f32
                preferred_element_type=jnp.float32)
    y = y + b2_ref[...]
    o_ref[...] = y.astype(o_ref.dtype)                                # .to(self.dtype)


def prepare_params(w1, b1, w2, b2):
    """One-time (init-time) parameter prep: bf16 MXU weights, f32 (1,H) biases."""
    H = w1.shape[1]
    return (w1.astype(jnp.bfloat16),
            b1.reshape(1, H).astype(jnp.float32),
            w2.astype(jnp.bfloat16),
            b2.reshape(1, H).astype(jnp.float32))


def to_weights_dtype_forward(x, params, dtype=WEIGHTS_DTYPE, max_block_b=1024):
    """ToWeightsDType(TimestepEmbedding(D_in, H), dtype).forward(x)."""
    w1_bf, b1_2d, w2_bf, b2_2d = params
    B, D_in = x.shape
    H = w1_bf.shape[1]

    # Single grid step for typical batch sizes; only tile the batch (and shard
    # the "parallel" axis across the two v7x TensorCores) when rows-per-step
    # are large enough to amortize duplicated weight DMA + per-step overhead.
    if B <= max_block_b:
        tb = _round_up(max(B, 1), 8)   # sublane-aligned; ragged rows masked on store
        nb = 1
        semantics = ("arbitrary",)     # single step / single TC
    else:
        tb = _round_up(max_block_b, 8)
        nb = pl.cdiv(B, tb)            # ragged last block handled by Pallas masking
        semantics = ("parallel",)      # >= max_block_b rows per TC: split is worth it

    bytes_accessed = (
        B * D_in * 4       # x (f32, cast to bf16 in-kernel)
        + D_in * H * 2     # w1 (bf16)
        + H * 4            # b1 (f32)
        + H * H * 2        # w2 (bf16)
        + H * 4            # b2 (f32)
        + B * H * 2        # out (bf16)
    )
    cost = pl.CostEstimate(
        flops=2 * B * (D_in * H + H * H),
        transcendentals=B * H,          # sigmoid
        bytes_accessed=bytes_accessed,
    )

    return pl.pallas_call(
        _mlp_cast_kernel,
        out_shape=jax.ShapeDtypeStruct((B, H), dtype),
        grid=(nb,),
        in_specs=[
            pl.BlockSpec((tb, D_in), lambda i: (i, 0)),   # x: tiles over batch
            pl.BlockSpec((D_in, H), lambda i: (0, 0)),    # w1: VMEM-resident
            pl.BlockSpec((1, H), lambda i: (0, 0)),       # b1: VMEM-resident
            pl.BlockSpec((H, H), lambda i: (0, 0)),       # w2: VMEM-resident
            pl.BlockSpec((1, H), lambda i: (0, 0)),       # b2: VMEM-resident
        ],
        out_specs=pl.BlockSpec((tb, H), lambda i: (i, 0)),
        compiler_params=pltpu.CompilerParams(
            dimension_semantics=semantics,
        ),
        cost_estimate=cost,
    )(x, w1_bf, b1_2d, w2_bf, b2_2d)


def reference_forward(x, w1, b1, w2, b2, dtype=WEIGHTS_DTYPE):
    h = x @ w1 + b1
    h = h * jax.nn.sigmoid(h)
    y = h @ w2 + b2
    return y.astype(dtype)


def _check(out, ref, shape):
    assert out.shape == shape and out.dtype == WEIGHTS_DTYPE
    assert jnp.allclose(out.astype(jnp.float32), ref.astype(jnp.float32),
                        atol=2e-2, rtol=2e-2)


if __name__ == "__main__":
    key = jax.random.PRNGKey(0)
    k_x, k_w1, k_b1, k_w2, k_b2 = jax.random.split(key, 5)

    D_IN, H = 16, 256  # TimestepEmbedding-like shapes (small)

    # Deterministic synthetic parameters (no checkpoint loading).
    w1 = jax.random.normal(k_w1, (D_IN, H), dtype=jnp.float32) * 0.05
    b1 = jax.random.normal(k_b1, (H,), dtype=jnp.float32) * 0.01
    w2 = jax.random.normal(k_w2, (H, H), dtype=jnp.float32) * 0.05
    b2 = jax.random.normal(k_b2, (H,), dtype=jnp.float32) * 0.01

    # Init-time parameter prep (hoisted out of the forward path).
    params = prepare_params(w1, b1, w2, b2)

    # 1) Small batch (original usage): single grid step, exact block.
    B1 = 8
    x1 = jax.random.normal(k_x, (B1, D_IN), dtype=jnp.float32)
    out1 = to_weights_dtype_forward(x1, params)
    jax.block_until_ready(out1)
    _check(out1, reference_forward(x1, w1, b1, w2, b2), (B1, H))

    # 2) Ragged batch (B not a multiple of 8): single grid step, masked store.
    B2 = 50
    x2 = jax.random.normal(jax.random.fold_in(k_x, 1), (B2, D_IN), dtype=jnp.float32)
    out2 = to_weights_dtype_forward(x2, params)
    jax.block_until_ready(out2)
    _check(out2, reference_forward(x2, w1, b1, w2, b2), (B2, H))

    # 3) Multi-step "parallel" grid with a ragged last block (force small tb so
    #    the tiled path is exercised with small data).
    B3 = 300
    x3 = jax.random.normal(jax.random.fold_in(k_x, 2), (B3, D_IN), dtype=jnp.float32)
    out3 = to_weights_dtype_forward(x3, params, max_block_b=128)
    jax.block_until_ready(out3)
    _check(out3, reference_forward(x3, w1, b1, w2, b2), (B3, H))

    print("KERNEL_OK")
</pallas_src>

<mosaic_0001>
module attributes {stable_mosaic.version = 11 : i64} {
  func.func @_mlp_cast_kernel(%arg0: i32, %arg1: memref<8x16xf32, #tpu.memory_space<vmem>>, %arg2: memref<16x256xbf16, #tpu.memory_space<vmem>>, %arg3: memref<1x256xf32, #tpu.memory_space<vmem>>, %arg4: memref<256x256xbf16, #tpu.memory_space<vmem>>, %arg5: memref<1x256xf32, #tpu.memory_space<vmem>>, %arg6: memref<8x256xbf16, #tpu.memory_space<vmem>>) attributes {dimension_semantics = [#tpu.dimension_semantics<arbitrary>], iteration_bounds = array<i64: 1>, scalar_prefetch = 0 : i64, scratch_operands = 0 : i64, tpu.core_type = #tpu.core_type<tc>, window_params = [{transform_indices = @transform_0, window_bounds = array<i64: 8, 16>}, {pipeline_mode = #tpu.pipeline_mode<synchronous>, transform_indices = @transform_1, window_bounds = array<i64: 16, 256>}, {pipeline_mode = #tpu.pipeline_mode<synchronous>, transform_indices = @transform_2, window_bounds = array<i64: 1, 256>}, {pipeline_mode = #tpu.pipeline_mode<synchronous>, transform_indices = @transform_3, window_bounds = array<i64: 256, 256>}, {pipeline_mode = #tpu.pipeline_mode<synchronous>, transform_indices = @transform_4, window_bounds = array<i64: 1, 256>}, {transform_indices = @transform_5, window_bounds = array<i64: 8, 256>}]} {
    %c0 = arith.constant 0 : index
    %c0_0 = arith.constant 0 : index
    %0 = vector.load %arg1[%c0, %c0_0] : memref<8x16xf32, #tpu.memory_space<vmem>>, vector<8x16xf32>
    %1 = arith.truncf %0 : vector<8x16xf32> to vector<8x16xbf16>
    %c0_1 = arith.constant 0 : index
    %c0_2 = arith.constant 0 : index
    %2 = vector.load %arg2[%c0_1, %c0_2] : memref<16x256xbf16, #tpu.memory_space<vmem>>, vector<16x256xbf16>
    %cst = arith.constant dense<0.000000e+00> : vector<8x256xf32>
    %3 = tpu.matmul %1, %2, %cst {dimension_numbers = #tpu.dot_dimension_numbers<[1], [0], [0], [1], [0, 0, 1, 1], [], []>} : vector<8x16xbf16>, vector<16x256xbf16>, vector<8x256xf32> -> vector<8x256xf32>
    %c0_3 = arith.constant 0 : index
    %c0_4 = arith.constant 0 : index
    %4 = vector.load %arg3[%c0_3, %c0_4] : memref<1x256xf32, #tpu.memory_space<vmem>>, vector<1x256xf32>
    %5 = vector.broadcast %4 : vector<1x256xf32> to vector<8x256xf32>
    %6 = arith.addf %3, %5 : vector<8x256xf32>
    %7 = arith.negf %6 : vector<8x256xf32>
    %8 = math.exp %7 : vector<8x256xf32>
    %cst_5 = arith.constant 1.000000e+00 : f32
    %9 = vector.broadcast %cst_5 : f32 to vector<8x256xf32>
    %10 = arith.addf %9, %8 : vector<8x256xf32>
    %11 = arith.divf %9, %10 : vector<8x256xf32>
    %12 = arith.mulf %6, %11 : vector<8x256xf32>
    %13 = arith.truncf %12 : vector<8x256xf32> to vector<8x256xbf16>
    %c0_6 = arith.constant 0 : index
    %c0_7 = arith.constant 0 : index
    %14 = vector.load %arg4[%c0_6, %c0_7] : memref<256x256xbf16, #tpu.memory_space<vmem>>, vector<256x256xbf16>
    %cst_8 = arith.constant dense<0.000000e+00> : vector<8x256xf32>
    %15 = tpu.matmul %13, %14, %cst_8 {dimension_numbers = #tpu.dot_dimension_numbers<[1], [0], [0], [1], [0, 0, 1, 1], [], []>} : vector<8x256xbf16>, vector<256x256xbf16>, vector<8x256xf32> -> vector<8x256xf32>
    %c0_9 = arith.constant 0 : index
    %c0_10 = arith.constant 0 : index
    %16 = vector.load %arg5[%c0_9, %c0_10] : memref<1x256xf32, #tpu.memory_space<vmem>>, vector<1x256xf32>
    %17 = vector.broadcast %16 : vector<1x256xf32> to vector<8x256xf32>
    %18 = arith.addf %15, %17 : vector<8x256xf32>
    %19 = arith.truncf %18 : vector<8x256xf32> to vector<8x256xbf16>
    %c0_11 = arith.constant 0 : index
    %c0_12 = arith.constant 0 : index
    %20 = vector.load %arg6[%c0_11, %c0_12] : memref<8x256xbf16, #tpu.memory_space<vmem>>, vector<8x256xbf16>
    tpu.vector_store %arg6[%c0_11, %c0_12], %19 {strides = array<i32>} : memref<8x256xbf16, #tpu.memory_space<vmem>>, vector<8x256xbf16>,
    return
  }
  func.func @transform_0(%arg0: i32) -> (i32, i32) {
    %c0_i32 = arith.constant 0 : i32
    %c0_i32_0 = arith.constant 0 : i32
    return %arg0, %c0_i32 : i32, i32
  }
  func.func @transform_1(%arg0: i32) -> (i32, i32) {
    %c0_i32 = arith.constant 0 : i32
    %c0_i32_0 = arith.constant 0 : i32
    %c0_i32_1 = arith.constant 0 : i32
    return %c0_i32, %c0_i32_0 : i32, i32
  }
  func.func @transform_2(%arg0: i32) -> (i32, i32) {
    %c0_i32 = arith.constant 0 : i32
    %c0_i32_0 = arith.constant 0 : i32
    %c0_i32_1 = arith.constant 0 : i32
    return %c0_i32, %c0_i32_0 : i32, i32
  }
  func.func @transform_3(%arg0: i32) -> (i32, i32) {
    %c0_i32 = arith.constant 0 : i32
    %c0_i32_0 = arith.constant 0 : i32
    %c0_i32_1 = arith.constant 0 : i32
    return %c0_i32, %c0_i32_0 : i32, i32
  }
  func.func @transform_4(%arg0: i32) -> (i32, i32) {
    %c0_i32 = arith.constant 0 : i32
    %c0_i32_0 = arith.constant 0 : i32
    %c0_i32_1 = arith.constant 0 : i32
    return %c0_i32, %c0_i32_0 : i32, i32
  }
  func.func @transform_5(%arg0: i32) -> (i32, i32) {
    %c0_i32 = arith.constant 0 : i32
    %c0_i32_0 = arith.constant 0 : i32
    return %arg0, %c0_i32 : i32, i32
  }
}

</mosaic_0001>

<llo_original>
// kernel: tpu_custom_call.1
$region0: #{tpu_custom_call.1}
  #allocation0 [shape = 'u32[]', space=smem, size = 0x4, offset = 0x4, fixed_abs, tag = 'smem constant byte address 0x4 - core index']
  #allocation1 [shape = 'u32[144,128]{1,0:T(1,128)}', space=vmem, size = 0x12000, scoped, tag = 'internal scratch']
  %s0 = inlined_call_operand.hbm [shape: f32[8,16], index: 0, kind: input, shape index: {}]
  %s1 = inlined_call_operand.hbm [shape: bf16[16,256], index: 1, kind: input, shape index: {}]
  %s2 = inlined_call_operand.vmem [shape: f32[1,256], index: 2, kind: input, shape index: {}]
  %s3 = inlined_call_operand.hbm [shape: bf16[256,256], index: 3, kind: input, shape index: {}]
  %s4 = inlined_call_operand.vmem [shape: f32[1,256], index: 4, kind: input, shape index: {}]
  %s5 = inlined_call_operand.hbm [shape: bf16[8,256], index: 5, kind: output, shape index: {}]
  %s6 = sld [smem:[#allocation0]]
  $region42: #{tpu_custom_call.1} parent=0
    _
  %s8 = ssub.s32 1, %s6
  %s9 = scalar_select 0, %s8, %s6
  $region1: #{tpu_custom_call.1} parent=0
    #allocation2 [shape = 'u8[4096]{0}', space=vmem, size = 0x1000, scoped, tag = 'input window, operand 0, single buffered']
    #allocation3 [shape = 's32[1]{0}', space=sflag, size = 0x4, scoped, tag = 'scoped memory for tpu_custom_call.1']
    #allocation4 [shape = 's32[1]{0}', space=sflag, size = 0x4, scoped, tag = 'scoped memory for tpu_custom_call.1']
    #allocation5 [shape = 'u8[8192]{0}', space=vmem, size = 0x2000, scoped, tag = 'input window, operand 1, single buffered']
    #allocation6 [shape = 's32[1]{0}', space=sflag, size = 0x4, scoped, tag = 'scoped memory for tpu_custom_call.1']
    #allocation7 [shape = 'u8[131072]{0}', space=vmem, size = 0x20000, scoped, tag = 'input window, operand 3, single buffered']
    #allocation8 [shape = 'u8[4096]{0}', space=vmem, size = 0x1000, scoped, tag = 'output window, operand 0, single buffered']
    %10 = vsyncpa [#allocation3], 0
    %11 = vsyncpa [#allocation6], 0
    %12 = vsyncpa [#allocation4], 0
    // Predicated region
    $region2: #{tpu_custom_call.1} parent=1 // pred_check
      _
    $region3: #{tpu_custom_call.1} parent=1 // pred_check_branch
      %14 = sbr.rel (0) target = $region5
    $region4: #{tpu_custom_call.1} parent=1 // pred_region
      %s16 = ssub.s32 128, 128
      %17 = vsyncadd [#allocation3], %s16
      %s19 = sshll.u32 [#allocation2], 4
      %s20 = int_to_ptr.vmem [resolvable:$true] %s19
      %22 = dma.hbm_to_vmem [thread:$0]  %s0, 128, %s20, [#allocation3]
    $region5: #{tpu_custom_call.1} parent=1 // pred_fallthru
      _
    // Predicated region
    $region6: #{tpu_custom_call.1} parent=1 // pred_check
      _
    $region7: #{tpu_custom_call.1} parent=1 // pred_check_branch
      %24 = sbr.rel (0) target = $region9
    $region8: #{tpu_custom_call.1} parent=1 // pred_region
      %s26 = ssub.s32 256, 256
      %27 = vsyncadd [#allocation6], %s26
      %s28 = sshll.u32 [#allocation5], 4
      %s29 = int_to_ptr.vmem [resolvable:$true] %s28
      %34 = dma.hbm_to_vmem [thread:$0]  %s1, 256, %s29, [#allocation6], 128, 128, 8
    $region9: #{tpu_custom_call.1} parent=1 // pred_fallthru
      _
    // Predicated region
    $region10: #{tpu_custom_call.1} parent=1 // pred_check
      _
    $region11: #{tpu_custom_call.1} parent=1 // pred_check_branch
      %36 = sbr.rel (0) target = $region13
    $region12: #{tpu_custom_call.1} parent=1 // pred_region
      _
    $region13: #{tpu_custom_call.1} parent=1 // pred_fallthru
      _
    // Predicated region
    $region14: #{tpu_custom_call.1} parent=1 // pred_check
      _
    $region15: #{tpu_custom_call.1} parent=1 // pred_check_branch
      %38 = sbr.rel (0) target = $region17
    $region16: #{tpu_custom_call.1} parent=1 // pred_region
      %s40 = ssub.s32 4096, 4096
      %41 = vsyncadd [#allocation6], %s40
      %s42 = sshll.u32 [#allocation7], 4
      %s43 = int_to_ptr.vmem [resolvable:$true] %s42
      %48 = dma.hbm_to_vmem [thread:$0]  %s3, 4096, %s43, [#allocation6], 128, 128, 8
    $region17: #{tpu_custom_call.1} parent=1 // pred_fallthru
      _
    // Predicated region
    $region18: #{tpu_custom_call.1} parent=1 // pred_check
      _
    $region19: #{tpu_custom_call.1} parent=1 // pred_check_branch
      %50 = sbr.rel (0) target = $region21
    $region20: #{tpu_custom_call.1} parent=1 // pred_region
      _
    $region21: #{tpu_custom_call.1} parent=1 // pred_fallthru
      _
    // Predicated region
    $region22: #{tpu_custom_call.1} parent=1 // pred_check
      _
    $region23: #{tpu_custom_call.1} parent=1 // pred_check_branch
      %52 = sbr.rel (0) target = $region25
    $region24: #{tpu_custom_call.1} parent=1 // pred_region
      %53 = dma.done [#allocation3], 128
    $region25: #{tpu_custom_call.1} parent=1 // pred_fallthru
      _
    // Predicated region
    $region26: #{tpu_custom_call.1} parent=1 // pred_check
      _
    $region27: #{tpu_custom_call.1} parent=1 // pred_check_branch
      %55 = sbr.rel (0) target = $region29
    $region28: #{tpu_custom_call.1} parent=1 // pred_region
      %56 = dma.done [#allocation6], 256
    $region29: #{tpu_custom_call.1} parent=1 // pred_fallthru
      _
    // Predicated region
    $region30: #{tpu_custom_call.1} parent=1 // pred_check
      _
    $region31: #{tpu_custom_call.1} parent=1 // pred_check_branch
      %58 = sbr.rel (0) target = $region33
    $region32: #{tpu_custom_call.1} parent=1 // pred_region
      %59 = dma.done [#allocation6], 4096
    $region33: #{tpu_custom_call.1} parent=1 // pred_fallthru
      _
    %v61 = vld [vmem:[#allocation2] sm:$0xff]
    %v62 = vpack.c.bf16 %v61, %v61
    %v63 = vld [vmem:[#allocation5] sm:$0xff]
    %v64 = vld [vmem:[#allocation5 + $0x8] sm:$0xff]
    %v65 = vld [vmem:[%s2] sm:$0x3]
    %v67 = vlaneseq
    %v68 = vshrl.u32 %v67, 7
    %v69 = vsub.s32 0, %v68
    %v70 = vrot.slane %v65, %v69
    %v71 = vlaneseq
    %v72 = vshrl.u32 %v71, 7
    %v73 = vsub.s32 1, %v72
    %v74 = vrot.slane %v65, %v73
    %v79 = vunpack.c.l.b16 %v63
    %v80 = vunpack.c.h.b16 %v63
    %v81 = vunpack.c.l.b16 %v64
    %v82 = vunpack.c.h.b16 %v64
    %v83 = vpack.c.b16 %v81, %v79
    %v84 = vpack.c.b16 %v82, %v80
    %vm87 = vcmask 130048
    %v89 = vsel %vm87, %v62, 0
    %91 = vmatprep.subr.bf16.mxu0 %v84
    %92 = vmatpush1.bf16.msra.mxu0 %v83
    %93 = vmatprep.subr.bf16.mxu0 0
    %94 = vmatpush1.bf16.msra.mxu0 0
    %95 = vmatprep.subr.bf16.mxu0 0
    %96 = vmatpush1.bf16.msra.mxu0 0
    %97 = vmatprep.subr.bf16.mxu0 0
    %98 = vmatpush1.bf16.msra.mxu0 0
    %99 = vmatprep.subr.bf16.mxu0 0
    %100 = vmatpush1.bf16.msra.mxu0 0
    %101 = vmatprep.subr.bf16.mxu0 0
    %102 = vmatpush1.bf16.msra.mxu0 0
    %103 = vmatprep.subr.bf16.mxu0 0
    %104 = vmatpush1.bf16.msra.mxu0 0
    %105 = vmatprep.subr.bf16.mxu0 0
    %106 = vmatpush1.bf16.msra.mxu0 0
    %107 = vmatprep.subr.bf16.mxu0 0
    %108 = vmatpush1.bf16.msra.mxu0 0
    %109 = vmatprep.subr.bf16.mxu0 0
    %110 = vmatpush1.bf16.msra.mxu0 0
    %111 = vmatprep.subr.bf16.mxu0 0
    %112 = vmatpush1.bf16.msra.mxu0 0
    %113 = vmatprep.subr.bf16.mxu0 0
    %114 = vmatpush1.bf16.msra.mxu0 0
    %115 = vmatprep.subr.bf16.mxu0 0
    %116 = vmatpush1.bf16.msra.mxu0 0
    %117 = vmatprep.subr.bf16.mxu0 0
    %118 = vmatpush1.bf16.msra.mxu0 0
    %119 = vmatprep.subr.bf16.mxu0 0
    %120 = vmatpush1.bf16.msra.mxu0 0
    %121 = vmatprep.subr.bf16.mxu0 0
    %122 = vmatpush1.bf16.msra.mxu0 0
    %123 = vmatprep.mubr.bf16.mxu0 0
    %124 = vmatmul.mubr.bf16.gmra.mrb[0].mxu0 %v89
    %v125 = vpop.f32.mrb[0].mxu0
    %v126 = vadd.f32 %v70, %v125
    %v127 = vpop.f32.mrb[0].mxu0
    %v128 = vadd.f32 %v74, %v127
    %v129 = vpop.f32.mrb[0].mxu0
    %v130 = vpop.f32.mrb[0].mxu0
    %131 = vdwg.mxu0
    %v132 = vxor.u32 %v126, 2147483648
    %v133 = vxor.u32 %v128, 2147483648
    %v134 = vmul.f32 %v132, 1.442695
    %v135 = vpow.pop %v134
    %v136 = vmul.f32 %v133, 1.442695
    %v137 = vpow.pop %v136
    %v138 = vadd.f32 %v135, 1.0
    %v139 = vadd.f32 %v137, 1.0
    %v140 = vrcp.pop %v138
    %v141 = vmul.f32 1.0, %v140
    %v142 = vrcp.pop %v139
    %v143 = vmul.f32 1.0, %v142
    %v144 = vmul.f32 %v126, %v141
    %v145 = vmul.f32 %v128, %v143
    %v146 = vpack.c.bf16 %v144, %v144
    %v147 = vpack.c.bf16 %v145, %v145
    %v148 = vld [vmem:[#allocation7] sm:$0xff]
    %v149 = vld [vmem:[#allocation7 + $0x8] sm:$0xff]
    %v150 = vld [vmem:[#allocation7 + $0x10] sm:$0xff]
    %v151 = vld [vmem:[#allocation7 + $0x18] sm:$0xff]
    %v152 = vld [vmem:[#allocation7 + $0x20] sm:$0xff]
    %v153 = vld [vmem:[#allocation7 + $0x28] sm:$0xff]
    %v154 = vld [vmem:[#allocation7 + $0x30] sm:$0xff]
    %v155 = vld [vmem:[#allocation7 + $0x38] sm:$0xff]
    %v156 = vld [vmem:[#allocation7 + $0x40] sm:$0xff]
    %v157 = vld [vmem:[#allocation7 + $0x48] sm:$0xff]
    %v158 = vld [vmem:[#allocation7 + $0x50] sm:$0xff]
    %v159 = vld [vmem:[#allocation7 + $0x58] sm:$0xff]
    %v160 = vld [vmem:[#allocation7 + $0x60] sm:$0xff]
    %v161 = vld [vmem:[#allocation7 + $0x68] sm:$0xff]
    %v162 = vld [vmem:[#allocation7 + $0x70] sm:$0xff]
    %v163 = vld [vmem:[#allocation7 + $0x78] sm:$0xff]
    %v164 = vld [vmem:[#allocation7 + $0x80] sm:$0xff]
    %v165 = vld [vmem:[#allocation7 + $0x88] sm:$0xff]
    %v166 = vld [vmem:[#allocation7 + $0x90] sm:$0xff]
    %v167 = vld [vmem:[#allocation7 + $0x98] sm:$0xff]
    %v168 = vld [vmem:[#allocation7 + $0xa0] sm:$0xff]
    %v169 = vld [vmem:[#allocation7 + $0xa8] sm:$0xff]
    %v170 = vld [vmem:[#allocation7 + $0xb0] sm:$0xff]
    %v171 = vld [vmem:[#allocation7 + $0xb8] sm:$0xff]
    %v172 = vld [vmem:[#allocation7 + $0xc0] sm:$0xff]
    %v173 = vld [vmem:[#allocation7 + $0xc8] sm:$0xff]
    %v174 = vld [vmem:[#allocation7 + $0xd0] sm:$0xff]
    %v175 = vld [vmem:[#allocation7 + $0xd8] sm:$0xff]
    %v176 = vld [vmem:[#allocation7 + $0xe0] sm:$0xff]
    %v177 = vld [vmem:[#allocation7 + $0xe8] sm:$0xff]
    %v178 = vld [vmem:[#allocation7 + $0xf0] sm:$0xff]
    %v179 = vld [vmem:[#allocation7 + $0xf8] sm:$0xff]
    %v180 = vld [vmem:[%s4] sm:$0x3]
    %v182 = vlaneseq
    %v183 = vshrl.u32 %v182, 7
    %v184 = vsub.s32 0, %v183
    %v185 = vrot.slane %v180, %v184
    %v186 = vlaneseq
    %v187 = vshrl.u32 %v186, 7
    %v188 = vsub.s32 1, %v187
    %v189 = vrot.slane %v180, %v188
    %v224 = vunpack.c.l.b16 %v148
    %v225 = vunpack.c.h.b16 %v148
    %v226 = vunpack.c.l.b16 %v149
    %v227 = vunpack.c.h.b16 %v149
    %v228 = vunpack.c.l.b16 %v150
    %v229 = vunpack.c.h.b16 %v150
    %v230 = vunpack.c.l.b16 %v151
    %v231 = vunpack.c.h.b16 %v151
    %v232 = vunpack.c.l.b16 %v152
    %v233 = vunpack.c.h.b16 %v152
    %v234 = vunpack.c.l.b16 %v153
    %v235 = vunpack.c.h.b16 %v153
    %v236 = vunpack.c.l.b16 %v154
    %v237 = vunpack.c.h.b16 %v154
    %v238 = vunpack.c.l.b16 %v155
    %v239 = vunpack.c.h.b16 %v155
    %v240 = vunpack.c.l.b16 %v156
    %v241 = vunpack.c.h.b16 %v156
    %v242 = vunpack.c.l.b16 %v157
    %v243 = vunpack.c.h.b16 %v157
    %v244 = vunpack.c.l.b16 %v158
    %v245 = vunpack.c.h.b16 %v158
    %v246 = vunpack.c.l.b16 %v159
    %v247 = vunpack.c.h.b16 %v159
    %v248 = vunpack.c.l.b16 %v160
    %v249 = vunpack.c.h.b16 %v160
    %v250 = vunpack.c.l.b16 %v161
    %v251 = vunpack.c.h.b16 %v161
    %v252 = vunpack.c.l.b16 %v162
    %v253 = vunpack.c.h.b16 %v162
    %v254 = vunpack.c.l.b16 %v163
    %v255 = vunpack.c.h.b16 %v163
    %v256 = vunpack.c.l.b16 %v164
    %v257 = vunpack.c.h.b16 %v164
    %v258 = vunpack.c.l.b16 %v165
    %v259 = vunpack.c.h.b16 %v165
    %v260 = vunpack.c.l.b16 %v166
    %v261 = vunpack.c.h.b16 %v166
    %v262 = vunpack.c.l.b16 %v167
    %v263 = vunpack.c.h.b16 %v167
    %v264 = vunpack.c.l.b16 %v168
    %v265 = vunpack.c.h.b16 %v168
    %v266 = vunpack.c.l.b16 %v169
    %v267 = vunpack.c.h.b16 %v169
    %v268 = vunpack.c.l.b16 %v170
    %v269 = vunpack.c.h.b16 %v170
    %v270 = vunpack.c.l.b16 %v171
    %v271 = vunpack.c.h.b16 %v171
    %v272 = vunpack.c.l.b16 %v172
    %v273 = vunpack.c.h.b16 %v172
    %v274 = vunpack.c.l.b16 %v173
    %v275 = vunpack.c.h.b16 %v173
    %v276 = vunpack.c.l.b16 %v174
    %v277 = vunpack.c.h.b16 %v174
    %v278 = vunpack.c.l.b16 %v175
    %v279 = vunpack.c.h.b16 %v175
    %v280 = vunpack.c.l.b16 %v176
    %v281 = vunpack.c.h.b16 %v176
    %v282 = vunpack.c.l.b16 %v177
    %v283 = vunpack.c.h.b16 %v177
    %v284 = vunpack.c.l.b16 %v178
    %v285 = vunpack.c.h.b16 %v178
    %v286 = vunpack.c.l.b16 %v179
    %v287 = vunpack.c.h.b16 %v179
    %v288 = vpack.c.b16 %v226, %v224
    %v289 = vpack.c.b16 %v227, %v225
    %v290 = vpack.c.b16 %v230, %v228
    %v291 = vpack.c.b16 %v231, %v229
    %v292 = vpack.c.b16 %v234, %v232
    %v293 = vpack.c.b16 %v235, %v233
    %v294 = vpack.c.b16 %v238, %v236
    %v295 = vpack.c.b16 %v239, %v237
    %v296 = vpack.c.b16 %v242, %v240
    %v297 = vpack.c.b16 %v243, %v241
    %v298 = vpack.c.b16 %v246, %v244
    %v299 = vpack.c.b16 %v247, %v245
    %v300 = vpack.c.b16 %v250, %v248
    %v301 = vpack.c.b16 %v251, %v249
    %v302 = vpack.c.b16 %v254, %v252
    %v303 = vpack.c.b16 %v255, %v253
    %v304 = vpack.c.b16 %v258, %v256
    %v305 = vpack.c.b16 %v259, %v257
    %v306 = vpack.c.b16 %v262, %v260
    %v307 = vpack.c.b16 %v263, %v261
    %v308 = vpack.c.b16 %v266, %v264
    %v309 = vpack.c.b16 %v267, %v265
    %v310 = vpack.c.b16 %v270, %v268
    %v311 = vpack.c.b16 %v271, %v269
    %v312 = vpack.c.b16 %v274, %v272
    %v313 = vpack.c.b16 %v275, %v273
    %v314 = vpack.c.b16 %v278, %v276
    %v315 = vpack.c.b16 %v279, %v277
    %v316 = vpack.c.b16 %v282, %v280
    %v317 = vpack.c.b16 %v283, %v281
    %v318 = vpack.c.b16 %v286, %v284
    %v319 = vpack.c.b16 %v287, %v285
    %352 = vmatprep.subr.bf16.mxu0 %v289
    %353 = vmatpush1.bf16.msra.mxu0 %v288
    %354 = vmatprep.subr.bf16.mxu0 %v291
    %355 = vmatpush1.bf16.msra.mxu0 %v290
    %356 = vmatprep.subr.bf16.mxu0 %v293
    %357 = vmatpush1.bf16.msra.mxu0 %v292
    %358 = vmatprep.subr.bf16.mxu0 %v295
    %359 = vmatpush1.bf16.msra.mxu0 %v294
    %360 = vmatprep.subr.bf16.mxu0 %v297
    %361 = vmatpush1.bf16.msra.mxu0 %v296
    %362 = vmatprep.subr.bf16.mxu0 %v299
    %363 = vmatpush1.bf16.msra.mxu0 %v298
    %364 = vmatprep.subr.bf16.mxu0 %v301
    %365 = vmatpush1.bf16.msra.mxu0 %v300
    %366 = vmatprep.subr.bf16.mxu0 %v303
    %367 = vmatpush1.bf16.msra.mxu0 %v302
    %368 = vmatprep.subr.bf16.mxu0 %v305
    %369 = vmatpush1.bf16.msra.mxu0 %v304
    %370 = vmatprep.subr.bf16.mxu0 %v307
    %371 = vmatpush1.bf16.msra.mxu0 %v306
    %372 = vmatprep.subr.bf16.mxu0 %v309
    %373 = vmatpush1.bf16.msra.mxu0 %v308
    %374 = vmatprep.subr.bf16.mxu0 %v311
    %375 = vmatpush1.bf16.msra.mxu0 %v310
    %376 = vmatprep.subr.bf16.mxu0 %v313
    %377 = vmatpush1.bf16.msra.mxu0 %v312
    %378 = vmatprep.subr.bf16.mxu0 %v315
    %379 = vmatpush1.bf16.msra.mxu0 %v314
    %380 = vmatprep.subr.bf16.mxu0 %v317
    %381 = vmatpush1.bf16.msra.mxu0 %v316
    %382 = vmatprep.subr.bf16.mxu0 %v319
    %383 = vmatpush1.bf16.msra.mxu0 %v318
    %384 = vmatprep.mubr.bf16.mxu0 %v147
    %385 = vmatmul.mubr.bf16.gmra.mrb[0].mxu0 %v146
    %v386 = vpop.f32.mrb[0].mxu0
    %v387 = vadd.f32 %v185, %v386
    %v388 = vpop.f32.mrb[0].mxu0
    %v389 = vadd.f32 %v189, %v388
    %v390 = vpop.f32.mrb[0].mxu0
    %v391 = vpop.f32.mrb[0].mxu0
    %392 = vdwg.mxu0
    %v393 = vpack.c.bf16 %v387, %v387
    %v394 = vpack.c.bf16 %v389, %v389
    %v397 = vunpack.c.l.b16 %v393
    %v398 = vunpack.c.l.b16 %v394
    %v399 = vpack.c.b16 %v398, %v397
    %401 = vst [vmem:[#allocation8] sm:$0xff] %v399
    // Predicated region
    $region34: #{tpu_custom_call.1} parent=1 // pred_check
      _
    $region35: #{tpu_custom_call.1} parent=1 // pred_check_branch
      %403 = sbr.rel (0) target = $region37
    $region36: #{tpu_custom_call.1} parent=1 // pred_region
      %s405 = ssub.s32 128, 128
      %406 = vsyncadd [#allocation4], %s405
      %s408 = sshll.u32 [#allocation8], 4
      %s409 = int_to_ptr.vmem [resolvable:$true] %s408
      %411 = dma.vmem_to_hbm [thread:$0]  %s409, 128, %s5, [#allocation4]
    $region37: #{tpu_custom_call.1} parent=1 // pred_fallthru
      _
    // Predicated region
    $region38: #{tpu_custom_call.1} parent=1 // pred_check
      _
    $region39: #{tpu_custom_call.1} parent=1 // pred_check_branch
      %413 = sbr.rel (0) target = $region41
    $region40: #{tpu_custom_call.1} parent=1 // pred_region
      %414 = dma.done [#allocation4], 128
    $region41: #{tpu_custom_call.1} parent=1 // pred_fallthru
      _
    %415 = vsyncpa [#allocation3], 1
    %416 = vsyncpa [#allocation6], 1
    %417 = vsyncpa [#allocation4], 1

</llo_original>
